<compile_context>
chip_gen: v7x
topology: tpu7x:2x2x1
jax: 0.10.0
libtpu: 0.0.40
codegen_flags: <defaults>
</compile_context>

<pallas_src>
import functools

import jax
import jax.numpy as jnp
import numpy as np
from jax.experimental import pallas as pl
from jax.experimental.pallas import tpu as pltpu


def decoder_step_kernel(
    emb_ref, hid_ref, encp_ref, enc_ref, mask_ref,            # activations
    wh_ref, v_ref,                                             # attention (enc projection hoisted)
    wih_ref, bih_ref, whh_ref, bhh_ref,                        # GRU (fused-K input weight)
    wout_ref, bout_ref,                                        # fc_out (fused K, V-tiled)
    pred_ref, hnew_ref, a_ref,                                 # outputs
    xr_s, xo_s,                                                # VMEM scratch: GRU-in / fc_out-in rows
    *, approx_recip=False,
):
    j = pl.program_id(1)                     # V-tile index (only fc_out depends on it)
    Bb, S, Dd = encp_ref.shape
    De2 = enc_ref.shape[2]
    E = emb_ref.shape[1]

    # ---- attention + context + GRU: once per batch block (j == 0); results cached in scratch ----
    @pl.when(j == 0)
    def _attention_and_gru():
        emb = emb_ref[...]                                     # (Bb, E)  f32
        hidden = hid_ref[...]                                  # (Bb, Dd) f32
        cd = wh_ref.dtype                                      # MXU compute dtype (f32 or bf16)

        # energy = tanh(enc_proj + hidden @ Wh); enc_proj = enc @ We + b_attn was hoisted out of
        # the decode step.  hp broadcasts over S (sublane) -- no jnp.tile materialization.
        hp = jnp.dot(hidden.astype(cd), wh_ref[...],
                     preferred_element_type=jnp.float32)       # (Bb, Dd)
        energy = jnp.tanh(encp_ref[...] + hp[:, None, :])      # (Bb, S, Dd)
        # v is a lane-dense (1, Dd) row: VPU multiply + lane reduce -> scores already in (Bb, S).
        scores = jnp.sum(energy * v_ref[...], axis=-1,
                         keepdims=True).reshape(Bb, S)         # (Bb, S), no transposes

        masked = jnp.where(mask_ref[...] == 0, jnp.float32(-1e10), scores)
        m = jnp.max(masked, axis=-1, keepdims=True)
        e = jnp.exp(masked - m)
        # eps guard: fully-masked (padded) rows cannot make the reciprocal blow up.
        denom = jnp.maximum(jnp.sum(e, axis=-1, keepdims=True), jnp.float32(1e-30))
        a = e * pl.reciprocal(denom, approx=approx_recip)      # (Bb, S)
        a_ref[...] = a

        # weighted[b, d] = sum_s a[b, s] * enc[s, b, d]: seq-major enc, lane-broadcast a[:, s].
        # TODO(synk): for long sources, stream S over an extra "arbitrary" grid axis instead of a
        #             full static unroll (also the v7x VMEM-diet path).
        weighted = jnp.zeros((Bb, De2), jnp.float32)
        for s in range(S):
            weighted = weighted + a[:, s:s + 1] * enc_ref[s].astype(jnp.float32)

        # GRU cell, PyTorch gate order (r, z, n).  Input cat(emb, weighted) is assembled in a VMEM
        # scratch row so it is a SINGLE small-K MXU push (K = E + De2) instead of two.
        xr_s[:, 0:E] = emb.astype(xr_s.dtype)
        xr_s[:, E:E + De2] = weighted.astype(xr_s.dtype)
        gi = jnp.dot(xr_s[...], wih_ref[...], preferred_element_type=jnp.float32) + bih_ref[...]
        gh = (jnp.dot(hidden.astype(cd), whh_ref[...], preferred_element_type=jnp.float32)
              + bhh_ref[...])
        r = jax.nn.sigmoid(gi[:, 0:Dd] + gh[:, 0:Dd])
        z = jax.nn.sigmoid(gi[:, Dd:2 * Dd] + gh[:, Dd:2 * Dd])
        n = jnp.tanh(gi[:, 2 * Dd:3 * Dd] + r * gh[:, 2 * Dd:3 * Dd])
        h_new = (1.0 - z) * n + z * hidden                     # (Bb, Dd) f32
        hnew_ref[...] = h_new

        # fc_out input row cat(h_new, weighted, emb) cached for every V tile of this batch block.
        xo_s[:, 0:Dd] = h_new.astype(xo_s.dtype)
        xo_s[:, Dd:Dd + De2] = weighted.astype(xo_s.dtype)
        xo_s[:, Dd + De2:Dd + De2 + E] = emb.astype(xo_s.dtype)

    # ---- fc_out: every (batch block, V tile) -> one fused-K matmul, lane-dense pred store -------
    pred_ref[...] = (jnp.dot(xo_s[...], wout_ref[...], preferred_element_type=jnp.float32)
                     + bout_ref[...])


def precompute_attention_keys(encoder_outputs, We, b_attn):
    """Hoisted out of the decode loop: enc @ We + b_attn is invariant across decode steps.

    encoder_outputs: (S, B, 2*De) seq-major (native layout; the raw tensor is never transposed).
    Returns enc_proj: (B, S, Dd) batch-major so in-kernel attention scores land directly in (B, S).
    """
    return (jnp.einsum("sbe,ed->bsd", encoder_outputs, We) + b_attn).astype(jnp.float32)


def decoder_step(input_ids, hidden, encoder_outputs, enc_proj, mask, params,
                 *, compute_dtype=jnp.float32, approx_recip=False):
    """One decode step.

    input_ids [B] int32, hidden [B, Dd], encoder_outputs [S, B, 2*De] seq-major,
    enc_proj [B, S, Dd] (from precompute_attention_keys), mask [B, S].
    """
    S, B, De2 = encoder_outputs.shape
    Dd = hidden.shape[1]
    E = params["emb"].shape[1]
    V = params["Wout"].shape[1]
    Kin = E + De2               # fused GRU-input K
    Kout = Dd + De2 + E         # fused fc_out K

    # TODO(synk): embedding row-gather stays in XLA (jnp.take); dropout is eval-mode identity.
    embedded = jnp.take(params["emb"], input_ids, axis=0).astype(jnp.float32)       # (B, E)

    # MXU operands in compute_dtype (bf16 on v6e/v7x in production); biases / softmax stay f32.
    # Production would store the weights pre-cast once instead of casting per step.
    cd = compute_dtype
    Wh = params["Wh"].astype(cd)
    Wih = params["Wih"].astype(cd)
    Whh = params["Whh"].astype(cd)
    Wout = params["Wout"].astype(cd)
    enc = encoder_outputs.astype(cd)

    # ---- tiling --------------------------------------------------------------------------------
    Bb = B if B <= 128 else 128                  # MXU M dim (raise to 256 on v6e/v7x if B allows)
    assert B % Bb == 0, "pad the batch to a multiple of the batch block"
    nb = B // Bb

    tV = V                                       # lane-dense V tile for fc_out weights / pred
    for cand in (512, 256, 128):
        if V > cand and V % cand == 0:
            tV = cand
            break
    nv = V // tV

    flops = 2 * B * (Dd * Dd + S * Dd + S * De2 + Kin * 3 * Dd + Dd * 3 * Dd + Kout * V)
    transcendentals = B * (S * Dd + S + 4 * Dd)
    bytes_accessed = 4 * (B * (E + Dd + S * Dd + S) + S * B * De2
                          + Dd * Dd + Dd + Kin * 3 * Dd + Dd * 3 * Dd + 6 * Dd
                          + Kout * V + V + B * (V + Dd + S))

    grid_spec = pltpu.PrefetchScalarGridSpec(
        num_scalar_prefetch=0,
        grid=(nb, nv),                           # (batch blocks, V tiles); j = 0 runs first per i
        in_specs=[
            pl.BlockSpec((Bb, E), lambda i, j: (i, 0)),             # embedded
            pl.BlockSpec((Bb, Dd), lambda i, j: (i, 0)),            # hidden
            pl.BlockSpec((Bb, S, Dd), lambda i, j: (i, 0, 0)),      # enc_proj (batch-major, hoisted)
            pl.BlockSpec((S, Bb, De2), lambda i, j: (0, i, 0)),     # enc (native seq-major)
            pl.BlockSpec((Bb, S), lambda i, j: (i, 0)),             # mask
            pl.BlockSpec((Dd, Dd), lambda i, j: (0, 0)),            # Wh
            pl.BlockSpec((1, Dd), lambda i, j: (0, 0)),             # v (lane-dense row, VPU path)
            pl.BlockSpec((Kin, 3 * Dd), lambda i, j: (0, 0)),       # W_ih (fused K)
            pl.BlockSpec((1, 3 * Dd), lambda i, j: (0, 0)),         # b_ih
            pl.BlockSpec((Dd, 3 * Dd), lambda i, j: (0, 0)),        # W_hh
            pl.BlockSpec((1, 3 * Dd), lambda i, j: (0, 0)),         # b_hh
            pl.BlockSpec((Kout, tV), lambda i, j: (0, j)),          # W_out (fused K, V-tiled)
            pl.BlockSpec((1, tV), lambda i, j: (0, j)),             # b_out (V-tiled)
        ],
        out_specs=[
            pl.BlockSpec((Bb, tV), lambda i, j: (i, j)),            # prediction (lane-dense tiles)
            pl.BlockSpec((Bb, Dd), lambda i, j: (i, 0)),            # new hidden
            pl.BlockSpec((Bb, S), lambda i, j: (i, 0)),             # attention weights
        ],
        scratch_shapes=[
            pltpu.VMEM((Bb, Kin), cd),                              # fused GRU-input row
            pltpu.VMEM((Bb, Kout), cd),                             # fused fc_out-input row
        ],
    )

    kernel = functools.partial(decoder_step_kernel, approx_recip=approx_recip)

    return pl.pallas_call(
        kernel,
        out_shape=(
            jax.ShapeDtypeStruct((B, V), jnp.float32),
            jax.ShapeDtypeStruct((B, Dd), jnp.float32),
            jax.ShapeDtypeStruct((B, S), jnp.float32),
        ),
        grid_spec=grid_spec,
        compiler_params=pltpu.CompilerParams(
            # batch blocks are independent (shard across v7x's 2 TCs once nb >= 2);
            # the V axis carries scratch written at j == 0, hence "arbitrary".
            dimension_semantics=("parallel", "arbitrary"),
            vmem_limit_bytes=32 * 1024 * 1024,
        ),
        cost_estimate=pl.CostEstimate(
            flops=flops, transcendentals=transcendentals, bytes_accessed=bytes_accessed),
    )(embedded, hidden, enc_proj.astype(jnp.float32), enc, mask,
      Wh, params["v"], Wih, params["b_ih"], Whh, params["b_hh"], Wout, params["b_out"])


def make_params(key, output_dim, emb_dim, enc_hid_dim, dec_hid_dim):
    """Deterministic synthetic init matching the PyTorch layer shapes."""
    De2 = 2 * enc_hid_dim
    Dd = dec_hid_dim
    E = emb_dim
    V = output_dim
    ks = jax.random.split(key, 10)

    emb_table = jax.random.normal(ks[0], (V, E), jnp.float32)

    # attention: attn = Linear(Dd + De2, Dd) on cat(hidden, enc); v = Linear(Dd, 1, bias=False)
    ba = 1.0 / np.sqrt(De2 + Dd)
    W_attn = jax.random.uniform(ks[1], (Dd, Dd + De2), jnp.float32, -ba, ba)
    b_attn = jax.random.uniform(ks[2], (Dd,), jnp.float32, -ba, ba)
    bv = 1.0 / np.sqrt(Dd)
    V_w = jax.random.uniform(ks[3], (1, Dd), jnp.float32, -bv, bv)

    # GRU(input = E + De2, hidden = Dd), PyTorch gate order (r, z, n)
    bg = 1.0 / np.sqrt(Dd)
    W_ih = jax.random.uniform(ks[4], (3 * Dd, E + De2), jnp.float32, -bg, bg)
    W_hh = jax.random.uniform(ks[5], (3 * Dd, Dd), jnp.float32, -bg, bg)
    b_ih = jax.random.uniform(ks[6], (3 * Dd,), jnp.float32, -bg, bg)
    b_hh = jax.random.uniform(ks[7], (3 * Dd,), jnp.float32, -bg, bg)

    # fc_out = Linear(Dd + De2 + E, V) on cat(h_new, weighted, embedded)
    bo = 1.0 / np.sqrt(Dd + De2 + E)
    W_out = jax.random.uniform(ks[8], (V, Dd + De2 + E), jnp.float32, -bo, bo)
    b_out = jax.random.uniform(ks[9], (V,), jnp.float32, -bo, bo)

    torch_params = dict(emb=emb_table, W_attn=W_attn, b_attn=b_attn, V_w=V_w,
                        W_ih=W_ih, W_hh=W_hh, b_ih=b_ih, b_hh=b_hh,
                        W_out=W_out, b_out=b_out)

    # Kernel layout: right-multiply [K, N] weights, (1, N) bias rows, fused concat-K matrices.
    kernel_params = dict(
        emb=emb_table,
        Wh=jnp.transpose(W_attn[:, :Dd]),        # (Dd, Dd)       acts on hidden   (per step)
        We=jnp.transpose(W_attn[:, Dd:]),        # (De2, Dd)      acts on enc      (hoisted, once)
        b_attn=b_attn,                           # (Dd,)          folded into enc_proj (hoisted)
        v=V_w,                                   # (1, Dd)        lane-dense row
        Wih=jnp.transpose(W_ih),                 # (E+De2, 3Dd)   rows ordered [emb; weighted]
        b_ih=b_ih.reshape(1, 3 * Dd),
        Whh=jnp.transpose(W_hh),                 # (Dd, 3Dd)
        b_hh=b_hh.reshape(1, 3 * Dd),
        Wout=jnp.transpose(W_out),               # (Dd+De2+E, V)  rows ordered [h_new; weighted; emb]
        b_out=b_out.reshape(1, V),
    )
    return kernel_params, torch_params


def decoder_reference(input_ids, hidden, encoder_outputs, mask, tp):
    """Plain-JAX replica of the PyTorch Decoder.forward (eval mode) for verification."""
    S, B, De2 = encoder_outputs.shape
    Dd = hidden.shape[1]
    embedded = tp["emb"][input_ids]                                   # (B, E)

    # attention
    h_rep = jnp.repeat(hidden[:, None, :], S, axis=1)                 # (B, S, Dd)
    enc_bm = jnp.transpose(encoder_outputs, (1, 0, 2))                # (B, S, De2)
    cat = jnp.concatenate([h_rep, enc_bm], axis=2)
    energy = jnp.tanh(cat @ tp["W_attn"].T + tp["b_attn"])
    att = (energy @ tp["V_w"].T)[..., 0]                              # (B, S)
    att = jnp.where(mask == 0, -1e10, att)
    a = jax.nn.softmax(att, axis=1)                                   # (B, S)

    weighted = jnp.einsum("bs,bsd->bd", a, enc_bm)                    # (B, De2)

    # GRU cell (r, z, n)
    x = jnp.concatenate([embedded, weighted], axis=1)
    gi = x @ tp["W_ih"].T + tp["b_ih"]
    gh = hidden @ tp["W_hh"].T + tp["b_hh"]
    r = jax.nn.sigmoid(gi[:, :Dd] + gh[:, :Dd])
    z = jax.nn.sigmoid(gi[:, Dd:2 * Dd] + gh[:, Dd:2 * Dd])
    n = jnp.tanh(gi[:, 2 * Dd:] + r * gh[:, 2 * Dd:])
    h_new = (1.0 - z) * n + z * hidden

    pred = jnp.concatenate([h_new, weighted, embedded], axis=1) @ tp["W_out"].T + tp["b_out"]
    return pred, h_new, a


if __name__ == "__main__":
    output_dim = 64      # vocab size
    emb_dim = 16
    enc_hid_dim = 16     # -> encoder feature dim 32
    dec_hid_dim = 32
    batch = 2
    src_len = 8

    key = jax.random.PRNGKey(0)
    kp, kh, ke, ki = jax.random.split(key, 4)
    kernel_params, torch_params = make_params(kp, output_dim, emb_dim, enc_hid_dim, dec_hid_dim)

    hidden = jax.random.normal(kh, (batch, dec_hid_dim), jnp.float32)
    encoder_outputs = jax.random.normal(ke, (src_len, batch, 2 * enc_hid_dim), jnp.float32)
    input_ids = jax.random.randint(ki, (batch,), 0, output_dim, dtype=jnp.int32)
    mask = jnp.array([[1, 1, 1, 1, 1, 0, 0, 0],
                      [1, 1, 1, 1, 1, 1, 1, 1]], dtype=jnp.int32)

    # Hoisted once per source sentence (invariant across decode steps).
    enc_proj = precompute_attention_keys(
        encoder_outputs, kernel_params["We"], kernel_params["b_attn"])

    # ---- f32 run: tight numerical self-check against the plain-JAX PyTorch replica --------------
    pred, h_new, a = decoder_step(input_ids, hidden, encoder_outputs, enc_proj, mask, kernel_params)
    pred, h_new, a = jax.block_until_ready((pred, h_new, a))

    pred_r, h_r, a_r = decoder_reference(input_ids, hidden, encoder_outputs, mask, torch_params)
    np.testing.assert_allclose(np.asarray(a), np.asarray(a_r), rtol=1e-3, atol=1e-3)
    np.testing.assert_allclose(np.asarray(h_new), np.asarray(h_r), rtol=1e-3, atol=1e-3)
    np.testing.assert_allclose(np.asarray(pred), np.asarray(pred_r), rtol=1e-3, atol=1e-3)

    # ---- production-style run: bf16 MXU operands + EUP approx reciprocal (loose sanity check) ---
    pred_b, h_b, a_b = decoder_step(input_ids, hidden, encoder_outputs, enc_proj, mask,
                                    kernel_params, compute_dtype=jnp.bfloat16, approx_recip=True)
    pred_b, h_b, a_b = jax.block_until_ready((pred_b, h_b, a_b))
    np.testing.assert_allclose(np.asarray(pred_b), np.asarray(pred_r), rtol=1e-1, atol=1e-1)

    print("KERNEL_OK")
</pallas_src>

<mosaic_0001>
module attributes {stable_mosaic.version = 11 : i64} {
  func.func @decoder_step_kernel(%arg0: i32, %arg1: i32, %arg2: memref<2x16xf32, #tpu.memory_space<vmem>>, %arg3: memref<2x32xf32, #tpu.memory_space<vmem>>, %arg4: memref<2x8x32xf32, #tpu.memory_space<vmem>>, %arg5: memref<8x2x32xf32, #tpu.memory_space<vmem>>, %arg6: memref<2x8xi32, #tpu.memory_space<vmem>>, %arg7: memref<32x32xf32, #tpu.memory_space<vmem>>, %arg8: memref<1x32xf32, #tpu.memory_space<vmem>>, %arg9: memref<48x96xf32, #tpu.memory_space<vmem>>, %arg10: memref<1x96xf32, #tpu.memory_space<vmem>>, %arg11: memref<32x96xf32, #tpu.memory_space<vmem>>, %arg12: memref<1x96xf32, #tpu.memory_space<vmem>>, %arg13: memref<80x64xf32, #tpu.memory_space<vmem>>, %arg14: memref<1x64xf32, #tpu.memory_space<vmem>>, %arg15: memref<2x64xf32, #tpu.memory_space<vmem>>, %arg16: memref<2x32xf32, #tpu.memory_space<vmem>>, %arg17: memref<2x8xf32, #tpu.memory_space<vmem>>, %arg18: memref<2x48xf32, #tpu.memory_space<vmem>>, %arg19: memref<2x80xf32, #tpu.memory_space<vmem>>) attributes {dimension_semantics = [#tpu.dimension_semantics<parallel>, #tpu.dimension_semantics<arbitrary>], iteration_bounds = array<i64: 1, 1>, scalar_prefetch = 0 : i64, scratch_operands = 2 : i64, tpu.core_type = #tpu.core_type<tc>, window_params = [{transform_indices = @transform_0, window_bounds = array<i64: 2, 16>}, {transform_indices = @transform_1, window_bounds = array<i64: 2, 32>}, {transform_indices = @transform_2, window_bounds = array<i64: 2, 8, 32>}, {transform_indices = @transform_3, window_bounds = array<i64: 8, 2, 32>}, {transform_indices = @transform_4, window_bounds = array<i64: 2, 8>}, {pipeline_mode = #tpu.pipeline_mode<synchronous>, transform_indices = @transform_5, window_bounds = array<i64: 32, 32>}, {pipeline_mode = #tpu.pipeline_mode<synchronous>, transform_indices = @transform_6, window_bounds = array<i64: 1, 32>}, {pipeline_mode = #tpu.pipeline_mode<synchronous>, transform_indices = @transform_7, window_bounds = array<i64: 48, 96>}, {pipeline_mode = #tpu.pipeline_mode<synchronous>, transform_indices = @transform_8, window_bounds = array<i64: 1, 96>}, {pipeline_mode = #tpu.pipeline_mode<synchronous>, transform_indices = @transform_9, window_bounds = array<i64: 32, 96>}, {pipeline_mode = #tpu.pipeline_mode<synchronous>, transform_indices = @transform_10, window_bounds = array<i64: 1, 96>}, {transform_indices = @transform_11, window_bounds = array<i64: 80, 64>}, {transform_indices = @transform_12, window_bounds = array<i64: 1, 64>}, {transform_indices = @transform_13, window_bounds = array<i64: 2, 64>}, {transform_indices = @transform_14, window_bounds = array<i64: 2, 32>}, {transform_indices = @transform_15, window_bounds = array<i64: 2, 8>}]} {
    %c0_i32 = arith.constant 0 : i32
    %0 = arith.cmpi eq, %arg1, %c0_i32 : i32
    %1 = arith.extui %0 : i1 to i32
    %c0_i32_0 = arith.constant 0 : i32
    %2 = arith.cmpi ne, %1, %c0_i32_0 : i32
    scf.if %2 {
      %c0_8 = arith.constant 0 : index
      %c0_9 = arith.constant 0 : index
      %10 = vector.load %arg2[%c0_8, %c0_9] : memref<2x16xf32, #tpu.memory_space<vmem>>, vector<2x16xf32>
      %c0_10 = arith.constant 0 : index
      %c0_11 = arith.constant 0 : index
      %11 = vector.load %arg3[%c0_10, %c0_11] : memref<2x32xf32, #tpu.memory_space<vmem>>, vector<2x32xf32>
      %c0_12 = arith.constant 0 : index
      %c0_13 = arith.constant 0 : index
      %12 = vector.load %arg7[%c0_12, %c0_13] : memref<32x32xf32, #tpu.memory_space<vmem>>, vector<32x32xf32>
      %cst_14 = arith.constant dense<0.000000e+00> : vector<2x32xf32>
      %13 = tpu.matmul %11, %12, %cst_14 {dimension_numbers = #tpu.dot_dimension_numbers<[1], [0], [0], [1], [0, 0, 1, 1], [], []>} : vector<2x32xf32>, vector<32x32xf32>, vector<2x32xf32> -> vector<2x32xf32>
      %c0_15 = arith.constant 0 : index
      %c0_16 = arith.constant 0 : index
      %c0_17 = arith.constant 0 : index
      %14 = vector.load %arg4[%c0_15, %c0_16, %c0_17] : memref<2x8x32xf32, #tpu.memory_space<vmem>>, vector<2x8x32xf32>
      %15 = vector.shape_cast %13 : vector<2x32xf32> to vector<2x1x32xf32>
      %16 = vector.broadcast %15 : vector<2x1x32xf32> to vector<2x8x32xf32>
      %17 = arith.addf %14, %16 : vector<2x8x32xf32>
      %18 = math.tanh %17 : vector<2x8x32xf32>
      %c0_18 = arith.constant 0 : index
      %c0_19 = arith.constant 0 : index
      %19 = vector.load %arg8[%c0_18, %c0_19] : memref<1x32xf32, #tpu.memory_space<vmem>>, vector<1x32xf32>
      %20 = vector.shape_cast %19 : vector<1x32xf32> to vector<1x1x32xf32>
      %21 = vector.broadcast %20 : vector<1x1x32xf32> to vector<2x8x32xf32>
      %22 = arith.mulf %18, %21 : vector<2x8x32xf32>
      %cst_20 = arith.constant dense<0.000000e+00> : vector<2x8xf32>
      %23 = vector.multi_reduction <add>, %22, %cst_20 [2] : vector<2x8x32xf32> to vector<2x8xf32>
      %24 = vector.shape_cast %23 : vector<2x8xf32> to vector<2x8x1xf32>
      %25 = vector.shape_cast %24 : vector<2x8x1xf32> to vector<2x8xf32>
      %c0_21 = arith.constant 0 : index
      %c0_22 = arith.constant 0 : index
      %26 = vector.load %arg6[%c0_21, %c0_22] : memref<2x8xi32, #tpu.memory_space<vmem>>, vector<2x8xi32>
      %c0_i32_23 = arith.constant 0 : i32
      %27 = vector.broadcast %c0_i32_23 : i32 to vector<2x8xi32>
      %28 = arith.cmpi eq, %26, %27 : vector<2x8xi32>
      %cst_24 = arith.constant -1.000000e+10 : f32
      %29 = vector.broadcast %cst_24 : f32 to vector<2x8xf32>
      %30 = arith.select %28, %29, %25 : vector<2x8xi1>, vector<2x8xf32>
      %cst_25 = arith.constant dense<0xFF800000> : vector<2xf32>
      %31 = vector.multi_reduction <maximumf>, %30, %cst_25 [1] : vector<2x8xf32> to vector<2xf32>
      %32 = vector.shape_cast %31 : vector<2xf32> to vector<2x1xf32>
      %33 = vector.broadcast %32 : vector<2x1xf32> to vector<2x8xf32>
      %34 = arith.subf %30, %33 : vector<2x8xf32>
      %35 = math.exp %34 : vector<2x8xf32>
      %cst_26 = arith.constant dense<0.000000e+00> : vector<2xf32>
      %36 = vector.multi_reduction <add>, %35, %cst_26 [1] : vector<2x8xf32> to vector<2xf32>
      %37 = vector.shape_cast %36 : vector<2xf32> to vector<2x1xf32>
      %cst_27 = arith.constant 1.000000e-30 : f32
      %38 = vector.broadcast %cst_27 : f32 to vector<2x1xf32>
      %39 = arith.maximumf %37, %38 : vector<2x1xf32>
      %40 = tpu.reciprocal %39 : vector<2x1xf32> -> vector<2x1xf32>
      %41 = vector.broadcast %40 : vector<2x1xf32> to vector<2x8xf32>
      %42 = arith.mulf %35, %41 : vector<2x8xf32>
      %c0_28 = arith.constant 0 : index
      %c0_29 = arith.constant 0 : index
      %43 = vector.load %arg17[%c0_28, %c0_29] : memref<2x8xf32, #tpu.memory_space<vmem>>, vector<2x8xf32>
      tpu.vector_store %arg17[%c0_28, %c0_29], %42 {strides = array<i32>} : memref<2x8xf32, #tpu.memory_space<vmem>>, vector<2x8xf32>,
      %cst_30 = arith.constant 0.000000e+00 : f32
      %44 = vector.broadcast %cst_30 : f32 to vector<2x32xf32>
      %45 = vector.extract_strided_slice %42 {offsets = [0, 0], sizes = [2, 1], strides = [1, 1]} : vector<2x8xf32> to vector<2x1xf32>
      %c0_31 = arith.constant 0 : index
      %c0_32 = arith.constant 0 : index
      %c0_33 = arith.constant 0 : index
      %46 = vector.load %arg5[%c0_31, %c0_32, %c0_33] : memref<8x2x32xf32, #tpu.memory_space<vmem>>, vector<1x2x32xf32>
      %47 = vector.shape_cast %46 : vector<1x2x32xf32> to vector<2x32xf32>
      %48 = vector.broadcast %45 : vector<2x1xf32> to vector<2x32xf32>
      %49 = arith.mulf %48, %47 : vector<2x32xf32>
      %50 = arith.addf %44, %49 : vector<2x32xf32>
      %51 = vector.extract_strided_slice %42 {offsets = [0, 1], sizes = [2, 1], strides = [1, 1]} : vector<2x8xf32> to vector<2x1xf32>
      %c1 = arith.constant 1 : index
      %c0_34 = arith.constant 0 : index
      %c0_35 = arith.constant 0 : index
      %52 = vector.load %arg5[%c1, %c0_34, %c0_35] : memref<8x2x32xf32, #tpu.memory_space<vmem>>, vector<1x2x32xf32>
      %53 = vector.shape_cast %52 : vector<1x2x32xf32> to vector<2x32xf32>
      %54 = vector.broadcast %51 : vector<2x1xf32> to vector<2x32xf32>
      %55 = arith.mulf %54, %53 : vector<2x32xf32>
      %56 = arith.addf %50, %55 : vector<2x32xf32>
      %57 = vector.extract_strided_slice %42 {offsets = [0, 2], sizes = [2, 1], strides = [1, 1]} : vector<2x8xf32> to vector<2x1xf32>
      %c2 = arith.constant 2 : index
      %c0_36 = arith.constant 0 : index
      %c0_37 = arith.constant 0 : index
      %58 = vector.load %arg5[%c2, %c0_36, %c0_37] : memref<8x2x32xf32, #tpu.memory_space<vmem>>, vector<1x2x32xf32>
      %59 = vector.shape_cast %58 : vector<1x2x32xf32> to vector<2x32xf32>
      %60 = vector.broadcast %57 : vector<2x1xf32> to vector<2x32xf32>
      %61 = arith.mulf %60, %59 : vector<2x32xf32>
      %62 = arith.addf %56, %61 : vector<2x32xf32>
      %63 = vector.extract_strided_slice %42 {offsets = [0, 3], sizes = [2, 1], strides = [1, 1]} : vector<2x8xf32> to vector<2x1xf32>
      %c3 = arith.constant 3 : index
      %c0_38 = arith.constant 0 : index
      %c0_39 = arith.constant 0 : index
      %64 = vector.load %arg5[%c3, %c0_38, %c0_39] : memref<8x2x32xf32, #tpu.memory_space<vmem>>, vector<1x2x32xf32>
      %65 = vector.shape_cast %64 : vector<1x2x32xf32> to vector<2x32xf32>
      %66 = vector.broadcast %63 : vector<2x1xf32> to vector<2x32xf32>
      %67 = arith.mulf %66, %65 : vector<2x32xf32>
      %68 = arith.addf %62, %67 : vector<2x32xf32>
      %69 = vector.extract_strided_slice %42 {offsets = [0, 4], sizes = [2, 1], strides = [1, 1]} : vector<2x8xf32> to vector<2x1xf32>
      %c4 = arith.constant 4 : index
      %c0_40 = arith.constant 0 : index
      %c0_41 = arith.constant 0 : index
      %70 = vector.load %arg5[%c4, %c0_40, %c0_41] : memref<8x2x32xf32, #tpu.memory_space<vmem>>, vector<1x2x32xf32>
      %71 = vector.shape_cast %70 : vector<1x2x32xf32> to vector<2x32xf32>
      %72 = vector.broadcast %69 : vector<2x1xf32> to vector<2x32xf32>
      %73 = arith.mulf %72, %71 : vector<2x32xf32>
      %74 = arith.addf %68, %73 : vector<2x32xf32>
      %75 = vector.extract_strided_slice %42 {offsets = [0, 5], sizes = [2, 1], strides = [1, 1]} : vector<2x8xf32> to vector<2x1xf32>
      %c5 = arith.constant 5 : index
      %c0_42 = arith.constant 0 : index
      %c0_43 = arith.constant 0 : index
      %76 = vector.load %arg5[%c5, %c0_42, %c0_43] : memref<8x2x32xf32, #tpu.memory_space<vmem>>, vector<1x2x32xf32>
      %77 = vector.shape_cast %76 : vector<1x2x32xf32> to vector<2x32xf32>
      %78 = vector.broadcast %75 : vector<2x1xf32> to vector<2x32xf32>
      %79 = arith.mulf %78, %77 : vector<2x32xf32>
      %80 = arith.addf %74, %79 : vector<2x32xf32>
      %81 = vector.extract_strided_slice %42 {offsets = [0, 6], sizes = [2, 1], strides = [1, 1]} : vector<2x8xf32> to vector<2x1xf32>
      %c6 = arith.constant 6 : index
      %c0_44 = arith.constant 0 : index
      %c0_45 = arith.constant 0 : index
      %82 = vector.load %arg5[%c6, %c0_44, %c0_45] : memref<8x2x32xf32, #tpu.memory_space<vmem>>, vector<1x2x32xf32>
      %83 = vector.shape_cast %82 : vector<1x2x32xf32> to vector<2x32xf32>
      %84 = vector.broadcast %81 : vector<2x1xf32> to vector<2x32xf32>
      %85 = arith.mulf %84, %83 : vector<2x32xf32>
      %86 = arith.addf %80, %85 : vector<2x32xf32>
      %87 = vector.extract_strided_slice %42 {offsets = [0, 7], sizes = [2, 1], strides = [1, 1]} : vector<2x8xf32> to vector<2x1xf32>
      %c7 = arith.constant 7 : index
      %c0_46 = arith.constant 0 : index
      %c0_47 = arith.constant 0 : index
      %88 = vector.load %arg5[%c7, %c0_46, %c0_47] : memref<8x2x32xf32, #tpu.memory_space<vmem>>, vector<1x2x32xf32>
      %89 = vector.shape_cast %88 : vector<1x2x32xf32> to vector<2x32xf32>
      %90 = vector.broadcast %87 : vector<2x1xf32> to vector<2x32xf32>
      %91 = arith.mulf %90, %89 : vector<2x32xf32>
      %92 = arith.addf %86, %91 : vector<2x32xf32>
      %c0_48 = arith.constant 0 : index
      %c0_49 = arith.constant 0 : index
      %93 = vector.load %arg18[%c0_48, %c0_49] : memref<2x48xf32, #tpu.memory_space<vmem>>, vector<2x16xf32>
      tpu.vector_store %arg18[%c0_48, %c0_49], %10 {strides = array<i32>} : memref<2x48xf32, #tpu.memory_space<vmem>>, vector<2x16xf32>,
      %c0_50 = arith.constant 0 : index
      %c16 = arith.constant 16 : index
      %94 = vector.load %arg18[%c0_50, %c16] : memref<2x48xf32, #tpu.memory_space<vmem>>, vector<2x32xf32>
      tpu.vector_store %arg18[%c0_50, %c16], %92 {strides = array<i32>} : memref<2x48xf32, #tpu.memory_space<vmem>>, vector<2x32xf32>,
      %c0_51 = arith.constant 0 : index
      %c0_52 = arith.constant 0 : index
      %95 = vector.load %arg18[%c0_51, %c0_52] : memref<2x48xf32, #tpu.memory_space<vmem>>, vector<2x48xf32>
      %c0_53 = arith.constant 0 : index
      %c0_54 = arith.constant 0 : index
      %96 = vector.load %arg9[%c0_53, %c0_54] : memref<48x96xf32, #tpu.memory_space<vmem>>, vector<48x96xf32>
      %cst_55 = arith.constant dense<0.000000e+00> : vector<2x96xf32>
      %97 = tpu.matmul %95, %96, %cst_55 {dimension_numbers = #tpu.dot_dimension_numbers<[1], [0], [0], [1], [0, 0, 1, 1], [], []>} : vector<2x48xf32>, vector<48x96xf32>, vector<2x96xf32> -> vector<2x96xf32>
      %c0_56 = arith.constant 0 : index
      %c0_57 = arith.constant 0 : index
      %98 = vector.load %arg10[%c0_56, %c0_57] : memref<1x96xf32, #tpu.memory_space<vmem>>, vector<1x96xf32>
      %99 = vector.broadcast %98 : vector<1x96xf32> to vector<2x96xf32>
      %100 = arith.addf %97, %99 : vector<2x96xf32>
      %c0_58 = arith.constant 0 : index
      %c0_59 = arith.constant 0 : index
      %101 = vector.load %arg11[%c0_58, %c0_59] : memref<32x96xf32, #tpu.memory_space<vmem>>, vector<32x96xf32>
      %cst_60 = arith.constant dense<0.000000e+00> : vector<2x96xf32>
      %102 = tpu.matmul %11, %101, %cst_60 {dimension_numbers = #tpu.dot_dimension_numbers<[1], [0], [0], [1], [0, 0, 1, 1], [], []>} : vector<2x32xf32>, vector<32x96xf32>, vector<2x96xf32> -> vector<2x96xf32>
      %c0_61 = arith.constant 0 : index
      %c0_62 = arith.constant 0 : index
      %103 = vector.load %arg12[%c0_61, %c0_62] : memref<1x96xf32, #tpu.memory_space<vmem>>, vector<1x96xf32>
      %104 = vector.broadcast %103 : vector<1x96xf32> to vector<2x96xf32>
      %105 = arith.addf %102, %104 : vector<2x96xf32>
      %106 = vector.extract_strided_slice %100 {offsets = [0, 0], sizes = [2, 32], strides = [1, 1]} : vector<2x96xf32> to vector<2x32xf32>
      %107 = vector.extract_strided_slice %105 {offsets = [0, 0], sizes = [2, 32], strides = [1, 1]} : vector<2x96xf32> to vector<2x32xf32>
      %108 = arith.addf %106, %107 : vector<2x32xf32>
      %109 = arith.negf %108 : vector<2x32xf32>
      %110 = math.exp %109 : vector<2x32xf32>
      %cst_63 = arith.constant 1.000000e+00 : f32
      %111 = vector.broadcast %cst_63 : f32 to vector<2x32xf32>
      %112 = arith.addf %111, %110 : vector<2x32xf32>
      %113 = arith.divf %111, %112 : vector<2x32xf32>
      %114 = vector.extract_strided_slice %100 {offsets = [0, 32], sizes = [2, 32], strides = [1, 1]} : vector<2x96xf32> to vector<2x32xf32>
      %115 = vector.extract_strided_slice %105 {offsets = [0, 32], sizes = [2, 32], strides = [1, 1]} : vector<2x96xf32> to vector<2x32xf32>
      %116 = arith.addf %114, %115 : vector<2x32xf32>
      %117 = arith.negf %116 : vector<2x32xf32>
      %118 = math.exp %117 : vector<2x32xf32>
      %cst_64 = arith.constant 1.000000e+00 : f32
      %119 = vector.broadcast %cst_64 : f32 to vector<2x32xf32>
      %120 = arith.addf %119, %118 : vector<2x32xf32>
      %121 = arith.divf %119, %120 : vector<2x32xf32>
      %122 = vector.extract_strided_slice %100 {offsets = [0, 64], sizes = [2, 32], strides = [1, 1]} : vector<2x96xf32> to vector<2x32xf32>
      %123 = vector.extract_strided_slice %105 {offsets = [0, 64], sizes = [2, 32], strides = [1, 1]} : vector<2x96xf32> to vector<2x32xf32>
      %124 = arith.mulf %113, %123 : vector<2x32xf32>
      %125 = arith.addf %122, %124 : vector<2x32xf32>
      %126 = math.tanh %125 : vector<2x32xf32>
      %cst_65 = arith.constant 1.000000e+00 : f32
      %127 = vector.broadcast %cst_65 : f32 to vector<2x32xf32>
      %128 = arith.subf %127, %121 : vector<2x32xf32>
      %129 = arith.mulf %128, %126 : vector<2x32xf32>
      %130 = arith.mulf %121, %11 : vector<2x32xf32>
      %131 = arith.addf %129, %130 : vector<2x32xf32>
      %c0_66 = arith.constant 0 : index
      %c0_67 = arith.constant 0 : index
      %132 = vector.load %arg16[%c0_66, %c0_67] : memref<2x32xf32, #tpu.memory_space<vmem>>, vector<2x32xf32>
      tpu.vector_store %arg16[%c0_66, %c0_67], %131 {strides = array<i32>} : memref<2x32xf32, #tpu.memory_space<vmem>>, vector<2x32xf32>,
      %c0_68 = arith.constant 0 : index
      %c0_69 = arith.constant 0 : index
      %133 = vector.load %arg19[%c0_68, %c0_69] : memref<2x80xf32, #tpu.memory_space<vmem>>, vector<2x32xf32>
      tpu.vector_store %arg19[%c0_68, %c0_69], %131 {strides = array<i32>} : memref<2x80xf32, #tpu.memory_space<vmem>>, vector<2x32xf32>,
      %c0_70 = arith.constant 0 : index
      %c32 = arith.constant 32 : index
      %134 = vector.load %arg19[%c0_70, %c32] : memref<2x80xf32, #tpu.memory_space<vmem>>, vector<2x32xf32>
      tpu.vector_store %arg19[%c0_70, %c32], %92 {strides = array<i32>} : memref<2x80xf32, #tpu.memory_space<vmem>>, vector<2x32xf32>,
      %c0_71 = arith.constant 0 : index
      %c64 = arith.constant 64 : index
      %135 = vector.load %arg19[%c0_71, %c64] : memref<2x80xf32, #tpu.memory_space<vmem>>, vector<2x16xf32>
      tpu.vector_store %arg19[%c0_71, %c64], %10 {strides = array<i32>} : memref<2x80xf32, #tpu.memory_space<vmem>>, vector<2x16xf32>,
    } else {
    }
    %c0 = arith.constant 0 : index
    %c0_1 = arith.constant 0 : index
    %3 = vector.load %arg19[%c0, %c0_1] : memref<2x80xf32, #tpu.memory_space<vmem>>, vector<2x80xf32>
    %c0_2 = arith.constant 0 : index
    %c0_3 = arith.constant 0 : index
    %4 = vector.load %arg13[%c0_2, %c0_3] : memref<80x64xf32, #tpu.memory_space<vmem>>, vector<80x64xf32>
    %cst = arith.constant dense<0.000000e+00> : vector<2x64xf32>
    %5 = tpu.matmul %3, %4, %cst {dimension_numbers = #tpu.dot_dimension_numbers<[1], [0], [0], [1], [0, 0, 1, 1], [], []>} : vector<2x80xf32>, vector<80x64xf32>, vector<2x64xf32> -> vector<2x64xf32>
    %c0_4 = arith.constant 0 : index
    %c0_5 = arith.constant 0 : index
    %6 = vector.load %arg14[%c0_4, %c0_5] : memref<1x64xf32, #tpu.memory_space<vmem>>, vector<1x64xf32>
    %7 = vector.broadcast %6 : vector<1x64xf32> to vector<2x64xf32>
    %8 = arith.addf %5, %7 : vector<2x64xf32>
    %c0_6 = arith.constant 0 : index
    %c0_7 = arith.constant 0 : index
    %9 = vector.load %arg15[%c0_6, %c0_7] : memref<2x64xf32, #tpu.memory_space<vmem>>, vector<2x64xf32>
    tpu.vector_store %arg15[%c0_6, %c0_7], %8 {strides = array<i32>} : memref<2x64xf32, #tpu.memory_space<vmem>>, vector<2x64xf32>,
    return
  }
  func.func @transform_0(%arg0: i32, %arg1: i32) -> (i32, i32) {
    %c0_i32 = arith.constant 0 : i32
    %c0_i32_0 = arith.constant 0 : i32
    return %arg0, %c0_i32 : i32, i32
  }
  func.func @transform_1(%arg0: i32, %arg1: i32) -> (i32, i32) {
    %c0_i32 = arith.constant 0 : i32
    %c0_i32_0 = arith.constant 0 : i32
    return %arg0, %c0_i32 : i32, i32
  }
  func.func @transform_2(%arg0: i32, %arg1: i32) -> (i32, i32, i32) {
    %c0_i32 = arith.constant 0 : i32
    %c0_i32_0 = arith.constant 0 : i32
    %c0_i32_1 = arith.constant 0 : i32
    return %arg0, %c0_i32, %c0_i32_0 : i32, i32, i32
  }
  func.func @transform_3(%arg0: i32, %arg1: i32) -> (i32, i32, i32) {
    %c0_i32 = arith.constant 0 : i32
    %c0_i32_0 = arith.constant 0 : i32
    %c0_i32_1 = arith.constant 0 : i32
    return %c0_i32, %arg0, %c0_i32_0 : i32, i32, i32
  }
  func.func @transform_4(%arg0: i32, %arg1: i32) -> (i32, i32) {
    %c0_i32 = arith.constant 0 : i32
    %c0_i32_0 = arith.constant 0 : i32
    return %arg0, %c0_i32 : i32, i32
  }
  func.func @transform_5(%arg0: i32, %arg1: i32) -> (i32, i32) {
    %c0_i32 = arith.constant 0 : i32
    %c0_i32_0 = arith.constant 0 : i32
    %c0_i32_1 = arith.constant 0 : i32
    return %c0_i32, %c0_i32_0 : i32, i32
  }
  func.func @transform_6(%arg0: i32, %arg1: i32) -> (i32, i32) {
    %c0_i32 = arith.constant 0 : i32
    %c0_i32_0 = arith.constant 0 : i32
    %c0_i32_1 = arith.constant 0 : i32
    return %c0_i32, %c0_i32_0 : i32, i32
  }
  func.func @transform_7(%arg0: i32, %arg1: i32) -> (i32, i32) {
    %c0_i32 = arith.constant 0 : i32
    %c0_i32_0 = arith.constant 0 : i32
    %c0_i32_1 = arith.constant 0 : i32
    return %c0_i32, %c0_i32_0 : i32, i32
  }
  func.func @transform_8(%arg0: i32, %arg1: i32) -> (i32, i32) {
    %c0_i32 = arith.constant 0 : i32
    %c0_i32_0 = arith.constant 0 : i32
    %c0_i32_1 = arith.constant 0 : i32
    return %c0_i32, %c0_i32_0 : i32, i32
  }
  func.func @transform_9(%arg0: i32, %arg1: i32) -> (i32, i32) {
    %c0_i32 = arith.constant 0 : i32
    %c0_i32_0 = arith.constant 0 : i32
    %c0_i32_1 = arith.constant 0 : i32
    return %c0_i32, %c0_i32_0 : i32, i32
  }
  func.func @transform_10(%arg0: i32, %arg1: i32) -> (i32, i32) {
    %c0_i32 = arith.constant 0 : i32
    %c0_i32_0 = arith.constant 0 : i32
    %c0_i32_1 = arith.constant 0 : i32
    return %c0_i32, %c0_i32_0 : i32, i32
  }
  func.func @transform_11(%arg0: i32, %arg1: i32) -> (i32, i32) {
    %c0_i32 = arith.constant 0 : i32
    %c0_i32_0 = arith.constant 0 : i32
    return %c0_i32, %arg1 : i32, i32
  }
  func.func @transform_12(%arg0: i32, %arg1: i32) -> (i32, i32) {
    %c0_i32 = arith.constant 0 : i32
    %c0_i32_0 = arith.constant 0 : i32
    return %c0_i32, %arg1 : i32, i32
  }
  func.func @transform_13(%arg0: i32, %arg1: i32) -> (i32, i32) {
    %c0_i32 = arith.constant 0 : i32
    return %arg0, %arg1 : i32, i32
  }
  func.func @transform_14(%arg0: i32, %arg1: i32) -> (i32, i32) {
    %c0_i32 = arith.constant 0 : i32
    %c0_i32_0 = arith.constant 0 : i32
    return %arg0, %c0_i32 : i32, i32
  }
  func.func @transform_15(%arg0: i32, %arg1: i32) -> (i32, i32) {
    %c0_i32 = arith.constant 0 : i32
    %c0_i32_0 = arith.constant 0 : i32
    return %arg0, %c0_i32 : i32, i32
  }
}

</mosaic_0001>

<llo_original>
// kernel: tpu_custom_call.1
$region0: #{tpu_custom_call.1}
  #allocation0 [shape = 'u32[]', space=smem, size = 0x4, offset = 0x4, fixed_abs, tag = 'smem constant byte address 0x4 - core index']
  #allocation1 [shape = 'u32[144,128]{1,0:T(1,128)}', space=vmem, size = 0x12000, scoped, tag = 'internal scratch']
  #allocation2 [shape = 'f32[2,48]{1,0:T(2,128)}', space=vmem, size = 0x400, scoped, tag = 'scratch operand']
  #allocation3 [shape = 'f32[2,80]{1,0:T(2,128)}', space=vmem, size = 0x400, scoped, tag = 'scratch operand']
  %s0 = inlined_call_operand.hbm [shape: f32[2,16], index: 0, kind: input, shape index: {}]
  %s1 = inlined_call_operand.vmem [shape: f32[2,32], index: 1, kind: input, shape index: {}]
  %s2 = inlined_call_operand.vmem [shape: f32[2,8,32], index: 2, kind: input, shape index: {}]
  %s3 = inlined_call_operand.vmem [shape: f32[8,2,32], index: 3, kind: input, shape index: {}]
  %s4 = inlined_call_operand.vmem [shape: s32[2,8], index: 4, kind: input, shape index: {}]
  %s5 = inlined_call_operand.vmem [shape: f32[32,32], index: 5, kind: input, shape index: {}]
  %s6 = inlined_call_operand.vmem [shape: f32[1,32], index: 6, kind: input, shape index: {}]
  %s7 = inlined_call_operand.vmem [shape: f32[48,96], index: 7, kind: input, shape index: {}]
  %s8 = inlined_call_operand.vmem [shape: f32[1,96], index: 8, kind: input, shape index: {}]
  %s9 = inlined_call_operand.vmem [shape: f32[32,96], index: 9, kind: input, shape index: {}]
  %s10 = inlined_call_operand.vmem [shape: f32[1,96], index: 10, kind: input, shape index: {}]
  %s11 = inlined_call_operand.vmem [shape: f32[80,64], index: 11, kind: input, shape index: {}]
  %s12 = inlined_call_operand.vmem [shape: f32[1,64], index: 12, kind: input, shape index: {}]
  %s13 = inlined_call_operand.hbm [shape: f32[2,64], index: 13, kind: output, shape index: {0}]
  %s14 = inlined_call_operand.hbm [shape: f32[2,32], index: 14, kind: output, shape index: {1}]
  %s15 = inlined_call_operand.hbm [shape: f32[2,8], index: 15, kind: output, shape index: {2}]
  %16 = xla_tuple %s13, %s14, %s15
  %s17 = sld [smem:[#allocation0]]
  $region86: #{tpu_custom_call.1} parent=0
    _
  %s19 = ssub.s32 1, %s17
  %s20 = scalar_select 0, %s19, %s17
  $region1: #{tpu_custom_call.1} parent=0
    #allocation4 [shape = 'u8[1024]{0}', space=vmem, size = 0x400, scoped, tag = 'input window, operand 0, single buffered']
    #allocation5 [shape = 's32[1]{0}', space=sflag, size = 0x4, scoped, tag = 'scoped memory for tpu_custom_call.1']
    #allocation6 [shape = 's32[1]{0}', space=sflag, size = 0x4, scoped, tag = 'scoped memory for tpu_custom_call.1']
    #allocation7 [shape = 'u8[1024]{0}', space=vmem, size = 0x400, scoped, tag = 'output window, operand 0, single buffered']
    #allocation8 [shape = 'u8[1024]{0}', space=vmem, size = 0x400, scoped, tag = 'output window, operand 1, single buffered']
    #allocation9 [shape = 's32[1]{0}', space=sflag, size = 0x4, scoped, tag = 'scoped memory for tpu_custom_call.1']
    #allocation10 [shape = 'u8[1024]{0}', space=vmem, size = 0x400, scoped, tag = 'output window, operand 2, single buffered']
    %21 = vsyncpa [#allocation5], 0
    %22 = vsyncpa [#allocation6], 0
    %23 = vsyncpa [#allocation9], 0
    // Predicated region
    $region2: #{tpu_custom_call.1} parent=1 // pred_check
      _
    $region3: #{tpu_custom_call.1} parent=1 // pred_check_branch
      %25 = sbr.rel (0) target = $region5
    $region4: #{tpu_custom_call.1} parent=1 // pred_region
      %s27 = ssub.s32 32, 32
      %28 = vsyncadd [#allocation5], %s27
      %s30 = sshll.u32 [#allocation4], 4
      %s31 = int_to_ptr.vmem [resolvable:$true] %s30
      %33 = dma.hbm_to_vmem [thread:$0]  %s0, 32, %s31, [#allocation5]
    $region5: #{tpu_custom_call.1} parent=1 // pred_fallthru
      _
    // Predicated region
    $region6: #{tpu_custom_call.1} parent=1 // pred_check
      _
    $region7: #{tpu_custom_call.1} parent=1 // pred_check_branch
      %35 = sbr.rel (0) target = $region9
    $region8: #{tpu_custom_call.1} parent=1 // pred_region
      _
    $region9: #{tpu_custom_call.1} parent=1 // pred_fallthru
      _
    // Predicated region
    $region10: #{tpu_custom_call.1} parent=1 // pred_check
      _
    $region11: #{tpu_custom_call.1} parent=1 // pred_check_branch
      %37 = sbr.rel (0) target = $region13
    $region12: #{tpu_custom_call.1} parent=1 // pred_region
      _
    $region13: #{tpu_custom_call.1} parent=1 // pred_fallthru
      _
    // Predicated region
    $region14: #{tpu_custom_call.1} parent=1 // pred_check
      _
    $region15: #{tpu_custom_call.1} parent=1 // pred_check_branch
      %39 = sbr.rel (0) target = $region17
    $region16: #{tpu_custom_call.1} parent=1 // pred_region
      _
    $region17: #{tpu_custom_call.1} parent=1 // pred_fallthru
      _
    // Predicated region
    $region18: #{tpu_custom_call.1} parent=1 // pred_check
      _
    $region19: #{tpu_custom_call.1} parent=1 // pred_check_branch
      %41 = sbr.rel (0) target = $region21
    $region20: #{tpu_custom_call.1} parent=1 // pred_region
      _
    $region21: #{tpu_custom_call.1} parent=1 // pred_fallthru
      _
    // Predicated region
    $region22: #{tpu_custom_call.1} parent=1 // pred_check
      _
    $region23: #{tpu_custom_call.1} parent=1 // pred_check_branch
      %43 = sbr.rel (0) target = $region25
    $region24: #{tpu_custom_call.1} parent=1 // pred_region
      _
    $region25: #{tpu_custom_call.1} parent=1 // pred_fallthru
      _
    // Predicated region
    $region26: #{tpu_custom_call.1} parent=1 // pred_check
      _
    $region27: #{tpu_custom_call.1} parent=1 // pred_check_branch
      %45 = sbr.rel (0) target = $region29
    $region28: #{tpu_custom_call.1} parent=1 // pred_region
      _
    $region29: #{tpu_custom_call.1} parent=1 // pred_fallthru
      _
    // Predicated region
    $region30: #{tpu_custom_call.1} parent=1 // pred_check
      _
    $region31: #{tpu_custom_call.1} parent=1 // pred_check_branch
      %47 = sbr.rel (0) target = $region33
    $region32: #{tpu_custom_call.1} parent=1 // pred_region
      _
    $region33: #{tpu_custom_call.1} parent=1 // pred_fallthru
      _
    // Predicated region
    $region34: #{tpu_custom_call.1} parent=1 // pred_check
      _
    $region35: #{tpu_custom_call.1} parent=1 // pred_check_branch
      %49 = sbr.rel (0) target = $region37
    $region36: #{tpu_custom_call.1} parent=1 // pred_region
      _
    $region37: #{tpu_custom_call.1} parent=1 // pred_fallthru
      _
    // Predicated region
    $region38: #{tpu_custom_call.1} parent=1 // pred_check
      _
    $region39: #{tpu_custom_call.1} parent=1 // pred_check_branch
      %51 = sbr.rel (0) target = $region41
    $region40: #{tpu_custom_call.1} parent=1 // pred_region
      _
    $region41: #{tpu_custom_call.1} parent=1 // pred_fallthru
      _
    // Predicated region
    $region42: #{tpu_custom_call.1} parent=1 // pred_check
      _
    $region43: #{tpu_custom_call.1} parent=1 // pred_check_branch
      %53 = sbr.rel (0) target = $region45
    $region44: #{tpu_custom_call.1} parent=1 // pred_region
      _
    $region45: #{tpu_custom_call.1} parent=1 // pred_fallthru
      _
    // Predicated region
    $region46: #{tpu_custom_call.1} parent=1 // pred_check
      _
    $region47: #{tpu_custom_call.1} parent=1 // pred_check_branch
      %55 = sbr.rel (0) target = $region49
    $region48: #{tpu_custom_call.1} parent=1 // pred_region
      _
    $region49: #{tpu_custom_call.1} parent=1 // pred_fallthru
      _
    // Predicated region
    $region50: #{tpu_custom_call.1} parent=1 // pred_check
      _
    $region51: #{tpu_custom_call.1} parent=1 // pred_check_branch
      %57 = sbr.rel (0) target = $region53
    $region52: #{tpu_custom_call.1} parent=1 // pred_region
      _
    $region53: #{tpu_custom_call.1} parent=1 // pred_fallthru
      _
    // Predicated region
    $region54: #{tpu_custom_call.1} parent=1 // pred_check
      _
    $region55: #{tpu_custom_call.1} parent=1 // pred_check_branch
      %59 = sbr.rel (0) target = $region57
    $region56: #{tpu_custom_call.1} parent=1 // pred_region
      %60 = dma.done [#allocation5], 32
    $region57: #{tpu_custom_call.1} parent=1 // pred_fallthru
      _
    %p61 = scmp.eq.s32.totalorder 0, 0
    // Predicated region
    $region58: #{tpu_custom_call.1} parent=1 // pred_check
      %p62 = pneg %p61
    $region59: #{tpu_custom_call.1} parent=1 // pred_check_branch
      %64 = sbr.rel (%p62) target = $region61
    $region60: #{tpu_custom_call.1} parent=1 // pred_region
      %v65 = vld [vmem:[#allocation4] sm:$0x3]
      %v66 = vld [vmem:[%s1] sm:$0x3]
      %v67 = vld [vmem:[%s5] sm:$0xff]
      %v68 = vld [vmem:[%s5 + $0x8] sm:$0xff]
      %v69 = vld [vmem:[%s5 + $0x10] sm:$0xff]
      %v70 = vld [vmem:[%s5 + $0x18] sm:$0xff]
      %vm71 = vcmask 261120
      %v73 = vsel %vm71, %v66, 0
      %75 = vmatprep.subr.mxu0 0.0
      %76 = vmatpush1.msra.mxu0 %v67
      %77 = vmatprep.subr.mxu0 0.0
      %78 = vmatpush1.msra.mxu0 %v68
      %79 = vmatprep.subr.mxu0 0.0
      %80 = vmatpush1.msra.mxu0 %v69
      %81 = vmatprep.subr.mxu0 0.0
      %82 = vmatpush1.msra.mxu0 %v70
      %83 = vmatprep.subr.mxu0 0.0
      %84 = vmatpush1.msra.mxu0 0.0
      %85 = vmatprep.subr.mxu0 0.0
      %86 = vmatpush1.msra.mxu0 0.0
      %87 = vmatprep.subr.mxu0 0.0
      %88 = vmatpush1.msra.mxu0 0.0
      %89 = vmatprep.subr.mxu0 0.0
      %90 = vmatpush1.msra.mxu0 0.0
      %91 = vmatprep.subr.mxu0 0.0
      %92 = vmatpush1.msra.mxu0 0.0
      %93 = vmatprep.subr.mxu0 0.0
      %94 = vmatpush1.msra.mxu0 0.0
      %95 = vmatprep.subr.mxu0 0.0
      %96 = vmatpush1.msra.mxu0 0.0
      %97 = vmatprep.subr.mxu0 0.0
      %98 = vmatpush1.msra.mxu0 0.0
      %99 = vmatprep.subr.mxu0 0.0
      %100 = vmatpush1.msra.mxu0 0.0
      %101 = vmatprep.subr.mxu0 0.0
      %102 = vmatpush1.msra.mxu0 0.0
      %103 = vmatprep.subr.mxu0 0.0
      %104 = vmatpush1.msra.mxu0 0.0
      %105 = vmatprep.subr.mxu0 0.0
      %106 = vmatpush1.msra.mxu0 0.0
      %107 = vmatprep.subr.mxu0 0.0
      %108 = vmatpush1.msra.mxu0 0.0
      %109 = vmatprep.subr.mxu0 0.0
      %110 = vmatpush1.msra.mxu0 0.0
      %111 = vmatprep.subr.mxu0 0.0
      %112 = vmatpush1.msra.mxu0 0.0
      %113 = vmatprep.subr.mxu0 0.0
      %114 = vmatpush1.msra.mxu0 0.0
      %115 = vmatprep.subr.mxu0 0.0
      %116 = vmatpush1.msra.mxu0 0.0
      %117 = vmatprep.subr.mxu0 0.0
      %118 = vmatpush1.msra.mxu0 0.0
      %119 = vmatprep.subr.mxu0 0.0
      %120 = vmatpush1.msra.mxu0 0.0
      %121 = vmatprep.subr.mxu0 0.0
      %122 = vmatpush1.msra.mxu0 0.0
      %123 = vmatprep.subr.mxu0 0.0
      %124 = vmatpush1.msra.mxu0 0.0
      %125 = vmatprep.subr.mxu0 0.0
      %126 = vmatpush1.msra.mxu0 0.0
      %127 = vmatprep.subr.mxu0 0.0
      %128 = vmatpush1.msra.mxu0 0.0
      %129 = vmatprep.subr.mxu0 0.0
      %130 = vmatpush1.msra.mxu0 0.0
      %131 = vmatprep.subr.mxu0 0.0
      %132 = vmatpush1.msra.mxu0 0.0
      %133 = vmatprep.subr.mxu0 0.0
      %134 = vmatpush1.msra.mxu0 0.0
      %135 = vmatprep.subr.mxu0 0.0
      %136 = vmatpush1.msra.mxu0 0.0
      %137 = vmatprep.subr.mxu0 0.0
      %138 = vmatpush1.msra.mxu0 0.0
      %139 = vmatprep.mubr.f32.mxu0 0.0
      %140 = vmatmul.mubr.f32.gmra.mrb[0].mxu0 %v73
      %v141 = vpop.f32.mrb[0].mxu0
      %v142 = vadd.f32 0.0, %v141
      %v143 = vpop.f32.mrb[0].mxu0
      %144 = vdwg.mxu0
      %v145 = vld [vmem:[%s2] sm:$0xff]
      %v146 = vld [vmem:[%s2 + $0x8] sm:$0xff]
      %v149 = vunpack.c.l.s4 1966171168
      %v150 = vunpack.c.0.s8 %v149
      %v151 = vlaneseq
      %v152 = vshrl.u32 %v151, 7
      %v153 = vsub.s32 %v150, %v152
      %v154 = vrot.slane %v142, %v153
      %v155 = vcombine.high %v154, %v154
      %v157 = vunpack.c.l.s4 1966171168
      %v158 = vunpack.c.0.s8 %v157
      %v159 = vlaneseq
      %v160 = vshrl.u32 %v159, 7
      %v161 = vsub.s32 %v158, %v160
      %v162 = vrot.slane %v154, %v161
      %v164 = vunpack.c.l.s4 1966171168
      %v165 = vunpack.c.0.s8 %v164
      %v166 = vlaneseq
      %v167 = vshrl.u32 %v166, 7
      %v168 = vsub.s32 %v165, %v167
      %v169 = vrot.slane %v155, %v168
      %v170 = vlaneseq
      %v171 = vshrl.u32 %v170, 7
      %v172 = vsub.s32 0, %v171
      %v173 = vrot.slane %v162, %v172
      %v174 = vlaneseq
      %v175 = vshrl.u32 %v174, 7
      %v176 = vsub.s32 0, %v175
      %v177 = vrot.slane %v169, %v176
      %v180 = vadd.f32 %v145, %v173
      %v181 = vadd.f32 %v146, %v177
      %v182 = vtanh.pop %v180
      %v183 = vtanh.pop %v181
      %v184 = vld [vmem:[%s6] sm:$0x1]
      %v186 = vlaneseq
      %v187 = vshrl.u32 %v186, 7
      %v188 = vsub.s32 0, %v187
      %v189 = vrot.slane %v184, %v188
      %v191 = vmul.f32 %v182, %v189
      %v192 = vmul.f32 %v183, %v189
      %v193 = vsel %vm71, %v191, 0.0
      %194 = vadd.xlane.f32.xlu0 %v193
      %v195 = vpop.xlane.xlu0 %194
      %v196 = vsel %vm71, %v192, 0.0
      %197 = vadd.xlane.f32.xlu0 %v196
      %v198 = vpop.xlane.xlu0 %197
      %v199 = vld [vmem:[%s4] sm:$0x3]
      %vm200 = vcmp.eq.s32.totalorder %v199, 0
      %v203 = vlaneseq
      %v204 = vand.u32 %v203, 127
      %v205 = vlaneseq
      %v206 = vshrl.u32 %v205, 7
      %v207 = vsub.s32 %v204, %v206
      %v208 = vrot.slane %v195, %v207
      %v209 = vlaneseq
      %v210 = vshrl.u32 %v209, 7
      %v211 = vsub.s32 %v204, %v210
      %v212 = vrot.slane %v198, %v211
      %vm213 = vcmask 1041409
      %v214 = vsel %vm213, %v212, %v208
      %v216 = vsel %vm200, -1e+10, %v214
      %vm217 = vcmask 58368
      %v218 = vsel %vm217, %v216, -inf
      %219 = vmax.xlane.f32.xlu0 %v218
      %v220 = vpop.xlane.xlu0 %219
      %v221 = vsub.f32 %v216, %v220
      %v222 = vmul.f32 %v221, 1.442695
      %v223 = vpow.pop %v222
      %v224 = vsel %vm217, %v223, 0.0
      %225 = vadd.xlane.f32.xlu0 %v224
      %v226 = vpop.xlane.xlu0 %225
      %v227 = vmax.f32 %v226, 1e-30
      %v228 = vrcp.pop %v227
      %v229 = vmul.f32 %v223, %v228
      %230 = vst.msk [vmem:[#allocation10] sm:$0x3] %vm217, %v229
      %v231 = vld [vmem:[%s3] sm:$0x3]
      %233 = vset.pattern.permute.xlu0 0
      %234 = vperm.xlu0 %233, %v229
      %v235 = vpop.permute.xlu0 %234
      %v237 = vmul.f32 %v235, %v231
      %v238 = vadd.f32 %v237, 0.0
      %s239 = scalar_lea.vmem %s3, 2
      %v240 = vld [vmem:[%s239] sm:$0x3]
      %241 = vset.pattern.permute.xlu0 1
      %242 = vperm.xlu0 %241, %v229
      %v243 = vpop.permute.xlu0 %242
      %v245 = vmul.f32 %v243, %v240
      %v246 = vadd.f32 %v238, %v245
      %s247 = scalar_lea.vmem %s3, 4
      %v248 = vld [vmem:[%s247] sm:$0x3]
      %249 = vset.pattern.permute.xlu0 2
      %250 = vperm.xlu0 %249, %v229
      %v251 = vpop.permute.xlu0 %250
      %v253 = vmul.f32 %v251, %v248
      %v254 = vadd.f32 %v246, %v253
      %s255 = scalar_lea.vmem %s3, 6
      %v256 = vld [vmem:[%s255] sm:$0x3]
      %257 = vset.pattern.permute.xlu0 3
      %258 = vperm.xlu0 %257, %v229
      %v259 = vpop.permute.xlu0 %258
      %v261 = vmul.f32 %v259, %v256
      %v262 = vadd.f32 %v254, %v261
      %s263 = scalar_lea.vmem %s3, 8
      %v264 = vld [vmem:[%s263] sm:$0x3]
      %265 = vset.pattern.permute.xlu0 4
      %266 = vperm.xlu0 %265, %v229
      %v267 = vpop.permute.xlu0 %266
      %v269 = vmul.f32 %v267, %v264
      %v270 = vadd.f32 %v262, %v269
      %s271 = scalar_lea.vmem %s3, 10
      %v272 = vld [vmem:[%s271] sm:$0x3]
      %273 = vset.pattern.permute.xlu0 5
      %274 = vperm.xlu0 %273, %v229
      %v275 = vpop.permute.xlu0 %274
      %v277 = vmul.f32 %v275, %v272
      %v278 = vadd.f32 %v270, %v277
      %s279 = scalar_lea.vmem %s3, 12
      %v280 = vld [vmem:[%s279] sm:$0x3]
      %281 = vset.pattern.permute.xlu0 6
      %282 = vperm.xlu0 %281, %v229
      %v283 = vpop.permute.xlu0 %282
      %v285 = vmul.f32 %v283, %v280
      %v286 = vadd.f32 %v278, %v285
      %s287 = scalar_lea.vmem %s3, 14
      %v288 = vld [vmem:[%s287] sm:$0x3]
      %289 = vset.pattern.permute.xlu0 7
      %290 = vperm.xlu0 %289, %v229
      %v291 = vpop.permute.xlu0 %290
      %v293 = vmul.f32 %v291, %v288
      %v294 = vadd.f32 %v286, %v293
      %vm295 = vcmask 123904
      %296 = vst.msk [vmem:[#allocation2] sm:$0x3] %vm295, %v65
      %298 = vrot.lane.b32.xlu0 %v294, 16
      %v299 = vpop.permute.xlu0 %298
      %vm301 = vcmask 386176
      %302 = vst.msk [vmem:[#allocation2] sm:$0x3] %vm301, %v299
      %v303 = vld [vmem:[#allocation2] sm:$0x3]
      %v304 = vld [vmem:[%s7] sm:$0xff]
      %v305 = vld [vmem:[%s7 + $0x8] sm:$0xff]
      %v306 = vld [vmem:[%s7 + $0x10] sm:$0xff]
      %v307 = vld [vmem:[%s7 + $0x18] sm:$0xff]
      %v308 = vld [vmem:[%s7 + $0x20] sm:$0xff]
      %v309 = vld [vmem:[%s7 + $0x28] sm:$0xff]
      %v310 = vld [vmem:[%s8] sm:$0x1]
      %v312 = vlaneseq
      %v313 = vshrl.u32 %v312, 7
      %v314 = vsub.s32 0, %v313
      %v315 = vrot.slane %v310, %v314
      %vm317 = vcmask 392192
      %v319 = vsel %vm317, %v303, 0
      %321 = vmatprep.subr.mxu0 0.0
      %322 = vmatpush1.msra.mxu0 %v304
      %323 = vmatprep.subr.mxu0 0.0
      %324 = vmatpush1.msra.mxu0 %v305
      %325 = vmatprep.subr.mxu0 0.0
      %326 = vmatpush1.msra.mxu0 %v306
      %327 = vmatprep.subr.mxu0 0.0
      %328 = vmatpush1.msra.mxu0 %v307
      %329 = vmatprep.subr.mxu0 0.0
      %330 = vmatpush1.msra.mxu0 %v308
      %331 = vmatprep.subr.mxu0 0.0
      %332 = vmatpush1.msra.mxu0 %v309
      %333 = vmatprep.subr.mxu0 0.0
      %334 = vmatpush1.msra.mxu0 0.0
      %335 = vmatprep.subr.mxu0 0.0
      %336 = vmatpush1.msra.mxu0 0.0
      %337 = vmatprep.subr.mxu0 0.0
      %338 = vmatpush1.msra.mxu0 0.0
      %339 = vmatprep.subr.mxu0 0.0
      %340 = vmatpush1.msra.mxu0 0.0
      %341 = vmatprep.subr.mxu0 0.0
      %342 = vmatpush1.msra.mxu0 0.0
      %343 = vmatprep.subr.mxu0 0.0
      %344 = vmatpush1.msra.mxu0 0.0
      %345 = vmatprep.subr.mxu0 0.0
      %346 = vmatpush1.msra.mxu0 0.0
      %347 = vmatprep.subr.mxu0 0.0
      %348 = vmatpush1.msra.mxu0 0.0
      %349 = vmatprep.subr.mxu0 0.0
      %350 = vmatpush1.msra.mxu0 0.0
      %351 = vmatprep.subr.mxu0 0.0
      %352 = vmatpush1.msra.mxu0 0.0
      %353 = vmatprep.subr.mxu0 0.0
      %354 = vmatpush1.msra.mxu0 0.0
      %355 = vmatprep.subr.mxu0 0.0
      %356 = vmatpush1.msra.mxu0 0.0
      %357 = vmatprep.subr.mxu0 0.0
      %358 = vmatpush1.msra.mxu0 0.0
      %359 = vmatprep.subr.mxu0 0.0
      %360 = vmatpush1.msra.mxu0 0.0
      %361 = vmatprep.subr.mxu0 0.0
      %362 = vmatpush1.msra.mxu0 0.0
      %363 = vmatprep.subr.mxu0 0.0
      %364 = vmatpush1.msra.mxu0 0.0
      %365 = vmatprep.subr.mxu0 0.0
      %366 = vmatpush1.msra.mxu0 0.0
      %367 = vmatprep.subr.mxu0 0.0
      %368 = vmatpush1.msra.mxu0 0.0
      %369 = vmatprep.subr.mxu0 0.0
      %370 = vmatpush1.msra.mxu0 0.0
      %371 = vmatprep.subr.mxu0 0.0
      %372 = vmatpush1.msra.mxu0 0.0
      %373 = vmatprep.subr.mxu0 0.0
      %374 = vmatpush1.msra.mxu0 0.0
      %375 = vmatprep.subr.mxu0 0.0
      %376 = vmatpush1.msra.mxu0 0.0
      %377 = vmatprep.subr.mxu0 0.0
      %378 = vmatpush1.msra.mxu0 0.0
      %379 = vmatprep.subr.mxu0 0.0
      %380 = vmatpush1.msra.mxu0 0.0
      %381 = vmatprep.subr.mxu0 0.0
      %382 = vmatpush1.msra.mxu0 0.0
      %383 = vmatprep.subr.mxu0 0.0
      %384 = vmatpush1.msra.mxu0 0.0
      %385 = vmatprep.mubr.f32.mxu0 0.0
      %386 = vmatmul.mubr.f32.gmra.mrb[0].mxu0 %v319
      %v387 = vpop.f32.mrb[0].mxu0
      %v388 = vadd.f32 %v315, %v387
      %v389 = vpop.f32.mrb[0].mxu0
      %390 = vdwg.mxu0
      %v391 = vld [vmem:[%s9] sm:$0xff]
      %v392 = vld [vmem:[%s9 + $0x8] sm:$0xff]
      %v393 = vld [vmem:[%s9 + $0x10] sm:$0xff]
      %v394 = vld [vmem:[%s9 + $0x18] sm:$0xff]
      %v395 = vld [vmem:[%s10] sm:$0x1]
      %v397 = vlaneseq
      %v398 = vshrl.u32 %v397, 7
      %v399 = vsub.s32 0, %v398
      %v400 = vrot.slane %v395, %v399
      %402 = vmatprep.subr.mxu0 0.0
      %403 = vmatpush1.msra.mxu0 %v391
      %404 = vmatprep.subr.mxu0 0.0
      %405 = vmatpush1.msra.mxu0 %v392
      %406 = vmatprep.subr.mxu0 0.0
      %407 = vmatpush1.msra.mxu0 %v393
      %408 = vmatprep.subr.mxu0 0.0
      %409 = vmatpush1.msra.mxu0 %v394
      %410 = vmatprep.subr.mxu0 0.0
      %411 = vmatpush1.msra.mxu0 0.0
      %412 = vmatprep.subr.mxu0 0.0
      %413 = vmatpush1.msra.mxu0 0.0
      %414 = vmatprep.subr.mxu0 0.0
      %415 = vmatpush1.msra.mxu0 0.0
      %416 = vmatprep.subr.mxu0 0.0
      %417 = vmatpush1.msra.mxu0 0.0
      %418 = vmatprep.subr.mxu0 0.0
      %419 = vmatpush1.msra.mxu0 0.0
      %420 = vmatprep.subr.mxu0 0.0
      %421 = vmatpush1.msra.mxu0 0.0
      %422 = vmatprep.subr.mxu0 0.0
      %423 = vmatpush1.msra.mxu0 0.0
      %424 = vmatprep.subr.mxu0 0.0
      %425 = vmatpush1.msra.mxu0 0.0
      %426 = vmatprep.subr.mxu0 0.0
      %427 = vmatpush1.msra.mxu0 0.0
      %428 = vmatprep.subr.mxu0 0.0
      %429 = vmatpush1.msra.mxu0 0.0
      %430 = vmatprep.subr.mxu0 0.0
      %431 = vmatpush1.msra.mxu0 0.0
      %432 = vmatprep.subr.mxu0 0.0
      %433 = vmatpush1.msra.mxu0 0.0
      %434 = vmatprep.subr.mxu0 0.0
      %435 = vmatpush1.msra.mxu0 0.0
      %436 = vmatprep.subr.mxu0 0.0
      %437 = vmatpush1.msra.mxu0 0.0
      %438 = vmatprep.subr.mxu0 0.0
      %439 = vmatpush1.msra.mxu0 0.0
      %440 = vmatprep.subr.mxu0 0.0
      %441 = vmatpush1.msra.mxu0 0.0
      %442 = vmatprep.subr.mxu0 0.0
      %443 = vmatpush1.msra.mxu0 0.0
      %444 = vmatprep.subr.mxu0 0.0
      %445 = vmatpush1.msra.mxu0 0.0
      %446 = vmatprep.subr.mxu0 0.0
      %447 = vmatpush1.msra.mxu0 0.0
      %448 = vmatprep.subr.mxu0 0.0
      %449 = vmatpush1.msra.mxu0 0.0
      %450 = vmatprep.subr.mxu0 0.0
      %451 = vmatpush1.msra.mxu0 0.0
      %452 = vmatprep.subr.mxu0 0.0
      %453 = vmatpush1.msra.mxu0 0.0
      %454 = vmatprep.subr.mxu0 0.0
      %455 = vmatpush1.msra.mxu0 0.0
      %456 = vmatprep.subr.mxu0 0.0
      %457 = vmatpush1.msra.mxu0 0.0
      %458 = vmatprep.subr.mxu0 0.0
      %459 = vmatpush1.msra.mxu0 0.0
      %460 = vmatprep.subr.mxu0 0.0
      %461 = vmatpush1.msra.mxu0 0.0
      %462 = vmatprep.subr.mxu0 0.0
      %463 = vmatpush1.msra.mxu0 0.0
      %464 = vmatprep.subr.mxu0 0.0
      %465 = vmatpush1.msra.mxu0 0.0
      %466 = vmatprep.mubr.f32.mxu0 0.0
      %467 = vmatmul.mubr.f32.gmra.mrb[0].mxu0 %v73
      %v468 = vpop.f32.mrb[0].mxu0
      %v469 = vadd.f32 %v400, %v468
      %v470 = vpop.f32.mrb[0].mxu0
      %471 = vdwg.mxu0
      %v472 = vadd.f32 %v388, %v469
      %v473 = vxor.u32 %v472, 2147483648
      %v474 = vmul.f32 %v473, 1.442695
      %v475 = vpow.pop %v474
      %v476 = vadd.f32 %v475, 1.0
      %v477 = vrcp.pop %v476
      %v478 = vmul.f32 1.0, %v477
      %480 = vrot.lane.b32.xlu0 %v469, 64
      %v481 = vpop.permute.xlu0 %480
      %v483 = vmul.f32 %v478, %v481
      %485 = vrot.lane.b32.xlu0 %v483, 64
      %v486 = vpop.permute.xlu0 %485
      %v488 = vadd.f32 %v388, %v486
      %v489 = vtanh.pop %v488
      %v490 = vsub.f32 1.0, %v478
      %492 = vrot.lane.b32.xlu0 %v489, 96
      %v493 = vpop.permute.xlu0 %492
      %v495 = vmul.f32 %v490, %v493
      %496 = vrot.lane.b32.xlu0 %v66, 32
      %v497 = vpop.permute.xlu0 %496
      %v499 = vmul.f32 %v478, %v497
      %v500 = vadd.f32 %v495, %v499
      %502 = vrot.lane.b32.xlu0 %v500, 96
      %v503 = vpop.permute.xlu0 %502
      %vm505 = vcmask 254976
      %506 = vst.msk [vmem:[#allocation8] sm:$0x3] %vm505, %v503
      %507 = vst.msk [vmem:[#allocation3] sm:$0x3] %vm505, %v503
      %508 = vrot.lane.b32.xlu0 %v294, 32
      %v509 = vpop.permute.xlu0 %508
      %vm511 = vcmask 517376
      %512 = vst.msk [vmem:[#allocation3] sm:$0x3] %vm511, %v509
      %514 = vrot.lane.b32.xlu0 %v65, 64
      %v515 = vpop.permute.xlu0 %514
      %vm517 = vcmask 648704
      %518 = vst.msk [vmem:[#allocation3] sm:$0x3] %vm517, %v515
    $region61: #{tpu_custom_call.1} parent=1 // pred_fallthru
      _
    %v519 = vld [vmem:[#allocation3] sm:$0x3]
    %v520 = vld [vmem:[%s11] sm:$0xff]
    %v521 = vld [vmem:[%s11 + $0x8] sm:$0xff]
    %v522 = vld [vmem:[%s11 + $0x10] sm:$0xff]
    %v523 = vld [vmem:[%s11 + $0x18] sm:$0xff]
    %v524 = vld [vmem:[%s11 + $0x20] sm:$0xff]
    %v525 = vld [vmem:[%s11 + $0x28] sm:$0xff]
    %v526 = vld [vmem:[%s11 + $0x30] sm:$0xff]
    %v527 = vld [vmem:[%s11 + $0x38] sm:$0xff]
    %v528 = vld [vmem:[%s11 + $0x40] sm:$0xff]
    %v529 = vld [vmem:[%s11 + $0x48] sm:$0xff]
    %v530 = vld [vmem:[%s12] sm:$0x1]
    %v532 = vlaneseq
    %v533 = vshrl.u32 %v532, 7
    %v534 = vsub.s32 0, %v533
    %v535 = vrot.slane %v530, %v534
    %vm537 = vcmask 654336
    %v539 = vsel %vm537, %v519, 0
    %541 = vmatprep.subr.mxu0 0.0
    %542 = vmatpush1.msra.mxu0 %v520
    %543 = vmatprep.subr.mxu0 0.0
    %544 = vmatpush1.msra.mxu0 %v521
    %545 = vmatprep.subr.mxu0 0.0
    %546 = vmatpush1.msra.mxu0 %v522
    %547 = vmatprep.subr.mxu0 0.0
    %548 = vmatpush1.msra.mxu0 %v523
    %549 = vmatprep.subr.mxu0 0.0
    %550 = vmatpush1.msra.mxu0 %v524
    %551 = vmatprep.subr.mxu0 0.0
    %552 = vmatpush1.msra.mxu0 %v525
    %553 = vmatprep.subr.mxu0 0.0
    %554 = vmatpush1.msra.mxu0 %v526
    %555 = vmatprep.subr.mxu0 0.0
    %556 = vmatpush1.msra.mxu0 %v527
    %557 = vmatprep.subr.mxu0 0.0
    %558 = vmatpush1.msra.mxu0 %v528
    %559 = vmatprep.subr.mxu0 0.0
    %560 = vmatpush1.msra.mxu0 %v529
    %561 = vmatprep.subr.mxu0 0.0
    %562 = vmatpush1.msra.mxu0 0.0
    %563 = vmatprep.subr.mxu0 0.0
    %564 = vmatpush1.msra.mxu0 0.0
    %565 = vmatprep.subr.mxu0 0.0
    %566 = vmatpush1.msra.mxu0 0.0
    %567 = vmatprep.subr.mxu0 0.0
    %568 = vmatpush1.msra.mxu0 0.0
    %569 = vmatprep.subr.mxu0 0.0
    %570 = vmatpush1.msra.mxu0 0.0
    %571 = vmatprep.subr.mxu0 0.0
    %572 = vmatpush1.msra.mxu0 0.0
    %573 = vmatprep.subr.mxu0 0.0
    %574 = vmatpush1.msra.mxu0 0.0
    %575 = vmatprep.subr.mxu0 0.0
    %576 = vmatpush1.msra.mxu0 0.0
    %577 = vmatprep.subr.mxu0 0.0
    %578 = vmatpush1.msra.mxu0 0.0
    %579 = vmatprep.subr.mxu0 0.0
    %580 = vmatpush1.msra.mxu0 0.0
    %581 = vmatprep.subr.mxu0 0.0
    %582 = vmatpush1.msra.mxu0 0.0
    %583 = vmatprep.subr.mxu0 0.0
    %584 = vmatpush1.msra.mxu0 0.0
    %585 = vmatprep.subr.mxu0 0.0
    %586 = vmatpush1.msra.mxu0 0.0
    %587 = vmatprep.subr.mxu0 0.0
    %588 = vmatpush1.msra.mxu0 0.0
    %589 = vmatprep.subr.mxu0 0.0
    %590 = vmatpush1.msra.mxu0 0.0
    %591 = vmatprep.subr.mxu0 0.0
    %592 = vmatpush1.msra.mxu0 0.0
    %593 = vmatprep.subr.mxu0 0.0
    %594 = vmatpush1.msra.mxu0 0.0
    %595 = vmatprep.subr.mxu0 0.0
    %596 = vmatpush1.msra.mxu0 0.0
    %597 = vmatprep.subr.mxu0 0.0
    %598 = vmatpush1.msra.mxu0 0.0
    %599 = vmatprep.subr.mxu0 0.0
    %600 = vmatpush1.msra.mxu0 0.0
    %601 = vmatprep.subr.mxu0 0.0
    %602 = vmatpush1.msra.mxu0 0.0
    %603 = vmatprep.subr.mxu0 0.0
    %604 = vmatpush1.msra.mxu0 0.0
    %605 = vmatprep.mubr.f32.mxu0 0.0
    %606 = vmatmul.mubr.f32.gmra.mrb[0].mxu0 %v539
    %v607 = vpop.f32.mrb[0].mxu0
    %v608 = vadd.f32 %v535, %v607
    %v609 = vpop.f32.mrb[0].mxu0
    %610 = vdwg.mxu0
    %vm611 = vcmask 517120
    %612 = vst.msk [vmem:[#allocation7] sm:$0x3] %vm611, %v608
    // Predicated region
    $region62: #{tpu_custom_call.1} parent=1 // pred_check
      _
    $region63: #{tpu_custom_call.1} parent=1 // pred_check_branch
      %614 = sbr.rel (0) target = $region65
    $region64: #{tpu_custom_call.1} parent=1 // pred_region
      %s616 = ssub.s32 32, 32
      %617 = vsyncadd [#allocation6], %s616
      %s619 = sshll.u32 [#allocation7], 4
      %s620 = int_to_ptr.vmem [resolvable:$true] %s619
      %622 = dma.vmem_to_hbm [thread:$0]  %s620, 32, %s13, [#allocation6]
    $region65: #{tpu_custom_call.1} parent=1 // pred_fallthru
      _
    // Predicated region
    $region66: #{tpu_custom_call.1} parent=1 // pred_check
      _
    $region67: #{tpu_custom_call.1} parent=1 // pred_check_branch
      %624 = sbr.rel (0) target = $region69
    $region68: #{tpu_custom_call.1} parent=1 // pred_region
      %s626 = ssub.s32 32, 32
      %627 = vsyncadd [#allocation9], %s626
      %s629 = sshll.u32 [#allocation8], 4
      %s630 = int_to_ptr.vmem [resolvable:$true] %s629
      %632 = dma.vmem_to_hbm [thread:$0]  %s630, 32, %s14, [#allocation9]
    $region69: #{tpu_custom_call.1} parent=1 // pred_fallthru
      _
    // Predicated region
    $region70: #{tpu_custom_call.1} parent=1 // pred_check
      _
    $region71: #{tpu_custom_call.1} parent=1 // pred_check_branch
      %634 = sbr.rel (0) target = $region73
    $region72: #{tpu_custom_call.1} parent=1 // pred_region
      %s636 = ssub.s32 32, 32
      %637 = vsyncadd [#allocation9], %s636
      %s639 = sshll.u32 [#allocation10], 4
      %s640 = int_to_ptr.vmem [resolvable:$true] %s639
      %642 = dma.vmem_to_hbm [thread:$0]  %s640, 32, %s15, [#allocation9]
    $region73: #{tpu_custom_call.1} parent=1 // pred_fallthru
      _
    // Predicated region
    $region74: #{tpu_custom_call.1} parent=1 // pred_check
      _
    $region75: #{tpu_custom_call.1} parent=1 // pred_check_branch
      %644 = sbr.rel (0) target = $region77
    $region76: #{tpu_custom_call.1} parent=1 // pred_region
      %645 = dma.done [#allocation6], 32
    $region77: #{tpu_custom_call.1} parent=1 // pred_fallthru
      _
    // Predicated region
    $region78: #{tpu_custom_call.1} parent=1 // pred_check
      _
    $region79: #{tpu_custom_call.1} parent=1 // pred_check_branch
      %647 = sbr.rel (0) target = $region81
    $region80: #{tpu_custom_call.1} parent=1 // pred_region
      %648 = dma.done [#allocation9], 32
    $region81: #{tpu_custom_call.1} parent=1 // pred_fallthru
      _
    // Predicated region
    $region82: #{tpu_custom_call.1} parent=1 // pred_check
      _
    $region83: #{tpu_custom_call.1} parent=1 // pred_check_branch
      %650 = sbr.rel (0) target = $region85
    $region84: #{tpu_custom_call.1} parent=1 // pred_region
      %651 = dma.done [#allocation9], 32
    $region85: #{tpu_custom_call.1} parent=1 // pred_fallthru
      _
    %652 = vsyncpa [#allocation5], 1
    %653 = vsyncpa [#allocation6], 1
    %654 = vsyncpa [#allocation9], 1

</llo_original>
